<compile_context>
chip_gen: v6e
topology: v6e:2x2x1
jax: 0.10.0
libtpu: 0.0.40
codegen_flags: <defaults>
</compile_context>

<pallas_src>
import math

import jax
import jax.numpy as jnp
from jax.experimental import pallas as pl
from jax.experimental.pallas import tpu as pltpu


def _round_up(v, m):
    return -(-v // m) * m


def _sigmoid1(v):
    # sigmoid(x) == 0.5 * (1 + tanh(x/2)): a single EUP push per element.
    return 0.5 * (jnp.tanh(0.5 * v) + 1.0)


def _softsign_exact(v):
    # Feeds the recurrent cell state -> keep the exact divide.
    return v / (1.0 + jnp.abs(v))


def _softsign_approx(v):
    # Only feeds h, so the approximate EUP reciprocal (vrcp) is fine.
    return v * pl.reciprocal(1.0 + jnp.abs(v), approx=True)


def _make_kernel(n_sub, rows_per_sub):
    def kernel(x_ref, h_ref, c_ref, wii_ref, whh_ref, wccfi_ref, wcco_ref,
               bias_ref, h_out_ref, c_out_ref):
        H = c_ref.shape[-1]
        mxu_dtype = wii_ref.dtype          # bf16 by default (f32 optional)

        wii = wii_ref[...]                 # (D_in, 4H)  packed used gates
        whh = whh_ref[...]                 # (H,    4H)
        wcc_fi = wccfi_ref[...]            # (H, 2H) forget/input peephole, f32
        wcc_o = wcco_ref[...]              # (H, H)  output-gate peephole, f32
        bias = bias_ref[...]               # (1, 4H) f32

        # Two statically-unrolled sub-chunks: chunk s+1's gate math overlaps
        # chunk s's serialized output-gate peephole matmul on the MXU.
        for s in range(n_sub):
            r = pl.ds(s * rows_per_sub, rows_per_sub)
            x = x_ref[r, :].astype(mxu_dtype)
            h = h_ref[r, :].astype(mxu_dtype)
            c = c_ref[r, :].astype(jnp.float32)

            # wb = x @ w_ii + h @ w_hh + (b_ih + b_hh), used gates f,i,g,o.
            wb = (jnp.dot(x, wii, preferred_element_type=jnp.float32)
                  + jnp.dot(h, whh, preferred_element_type=jnp.float32)
                  + bias)

            # Forget / input peephole terms use the *old* cell state (f32).
            cc_fi = jnp.dot(c, wcc_fi, preferred_element_type=jnp.float32)

            forget_gate = _sigmoid1(wb[:, 0:H] + cc_fi[:, 0:H])
            input_gate = _sigmoid1(wb[:, H:2 * H] + cc_fi[:, H:2 * H])
            c_new = (forget_gate * c
                     + input_gate * _softsign_exact(wb[:, 2 * H:3 * H]))

            # Output-gate peephole uses the *updated* cell state (as PyTorch).
            cc_o = jnp.dot(c_new, wcc_o, preferred_element_type=jnp.float32)
            output_gate = _sigmoid1(wb[:, 3 * H:4 * H] + cc_o)
            h_new = output_gate * _softsign_approx(c_new)

            h_out_ref[r, :] = h_new.astype(h_out_ref.dtype)
            c_out_ref[r, :] = c_new.astype(c_out_ref.dtype)

    return kernel


def prepare_trace_lstm_params(params, *, mxu_dtype=jnp.bfloat16):
    """One-time weight prep, hoisted out of the per-call path.

    forward() only reads gate blocks 0, 1, 2, 4 of the 6 -> pack to 4H wide.
    The big x/h weights are pre-cast to the MXU operand dtype; the small
    peephole weights stay f32 so the recurrent state does not drift.
    """
    H = params["w_cc"].shape[0]

    def pack(w):
        return jnp.concatenate([w[..., :3 * H], w[..., 4 * H:5 * H]], axis=-1)

    w_cc = params["w_cc"].astype(jnp.float32)
    return {
        "w_ii": pack(params["w_ii"]).astype(mxu_dtype),
        "w_hh": pack(params["w_hh"]).astype(mxu_dtype),
        "w_cc_fi": w_cc[:, :2 * H],
        "w_cc_o": w_cc[:, 2 * H:3 * H],
        "bias": pack(params["b_ih"] + params["b_hh"])
                .reshape(1, 4 * H).astype(jnp.float32),
    }


def trace_lstm_cell(x, h, c, prep, *, tm=512, h_out_dtype=None,
                    single_buffer_weights=False):
    """Pallas TraceLSTMCell forward.  x: (B,S,D_in), h/c: (B,S,H)."""
    B, S, D_in = x.shape
    H = h.shape[-1]
    M = B * S
    if h_out_dtype is None:
        # Pass jnp.bfloat16 on v5e to cut h-store traffic if consumers allow.
        h_out_dtype = h.dtype

    # Row tile: multiple of 8 sublanes; shrink so small problems still span
    # >= 2 grid steps (both v7x TensorCores busy).  Ragged tails handled by
    # Pallas (grid = cdiv) -- no wrapper pad / slice copies.
    tm = min(tm, _round_up(pl.cdiv(M, 2), 8))
    tm = max(8, _round_up(tm, 8))
    grid = pl.cdiv(M, tm)

    n_sub = 2 if (tm >= 16 and tm % 16 == 0) else 1
    rows_per_sub = tm // n_sub

    # (B,S,F) -> (B*S,F) is a metadata-only reshape (no extra HBM pass).
    x2 = x.reshape(M, D_in)
    h2 = h.reshape(M, H)
    c2 = c.reshape(M, H)

    def row_spec(feat):
        return pl.BlockSpec((tm, feat), lambda i: (i, 0))

    def const_spec(r, cdim):
        # Constant index_map: these tiles are DMA'd once and reused across
        # the row grid.  On v7x (64 MiB VMEM) with large H, single-buffer
        # them (single_buffer_weights=True) to halve their VMEM footprint.
        if single_buffer_weights:
            return pl.BlockSpec((r, cdim), lambda i: (0, 0),
                                pipeline_mode=pl.Buffered(1))
        return pl.BlockSpec((r, cdim), lambda i: (0, 0))

    h_new, c_new = pl.pallas_call(
        _make_kernel(n_sub, rows_per_sub),
        out_shape=(jax.ShapeDtypeStruct((M, H), h_out_dtype),
                   jax.ShapeDtypeStruct((M, H), c.dtype)),
        grid_spec=pltpu.PrefetchScalarGridSpec(
            num_scalar_prefetch=0,
            grid=(grid,),
            in_specs=[row_spec(D_in),            # x rows
                      row_spec(H),               # h rows
                      row_spec(H),               # c rows
                      const_spec(D_in, 4 * H),   # w_ii  (packed used gates)
                      const_spec(H, 4 * H),      # w_hh  (packed used gates)
                      const_spec(H, 2 * H),      # w_cc[:, :2H]
                      const_spec(H, H),          # w_cc[:, 2H:3H]
                      const_spec(1, 4 * H)],     # b_ih + b_hh (packed)
            out_specs=[row_spec(H), row_spec(H)],
        ),
        compiler_params=pltpu.CompilerParams(
            dimension_semantics=("parallel",),
            vmem_limit_bytes=64 * 1024 * 1024),
    )(x2, h2, c2, prep["w_ii"], prep["w_hh"], prep["w_cc_fi"],
      prep["w_cc_o"], prep["bias"])

    return h_new.reshape(B, S, H), c_new.reshape(B, S, H)


def _softsign_ref(v):
    return v / (1.0 + jnp.abs(v))


def trace_lstm_ref(x, h, c, params):
    """Pure-JAX reference mirroring the PyTorch forward exactly."""
    H = h.shape[-1]
    bias = params["b_ih"] + params["b_hh"]
    wb = x @ params["w_ii"] + h @ params["w_hh"] + bias
    wbs = [wb[..., i * H:(i + 1) * H] for i in range(6)]
    wcs = [params["w_cc"][:, i * H:(i + 1) * H] for i in range(3)]
    forget_gate = jax.nn.sigmoid(wbs[0] + c @ wcs[0])
    input_gate = jax.nn.sigmoid(wbs[1] + c @ wcs[1])
    c_new = forget_gate * c + input_gate * _softsign_ref(wbs[2])
    output_gate = jax.nn.sigmoid(wbs[4] + c_new @ wcs[2])
    h_new = output_gate * _softsign_ref(c_new)
    return h_new, c_new


if __name__ == "__main__":
    key = jax.random.PRNGKey(0)
    B, S = 2, 8
    input_size, hidden_size = 64, 128

    stdv = 1.0 / math.sqrt(hidden_size)
    keys = jax.random.split(key, 8)

    def u(k, shape):
        return jax.random.uniform(k, shape, jnp.float32, -stdv, stdv)

    # Parameters the PyTorch module declares; w_ee, w_rr, b_k are unused in
    # forward() and therefore not kernel inputs.
    params = {
        "w_ii": u(keys[0], (input_size, 6 * hidden_size)),
        "w_hh": u(keys[1], (hidden_size, 6 * hidden_size)),
        "w_cc": u(keys[2], (hidden_size, 3 * hidden_size)),
        "b_ih": u(keys[3], (6 * hidden_size,)),
        "b_hh": u(keys[4], (6 * hidden_size,)),
    }

    x = jax.random.normal(keys[5], (B, S, input_size), jnp.float32)
    h = jax.random.normal(keys[6], (B, S, hidden_size), jnp.float32)
    c = jax.random.normal(keys[7], (B, S, hidden_size), jnp.float32)

    h_ref, c_ref = trace_lstm_ref(x, h, c, params)

    # Default path: bf16 MXU operands for the big x/h matmul, f32 peepholes.
    prep_bf16 = prepare_trace_lstm_params(params)       # once per param set
    h_new, c_new = trace_lstm_cell(x, h, c, prep_bf16)
    jax.block_until_ready((h_new, c_new))
    assert jnp.allclose(h_new, h_ref, atol=2e-2, rtol=2e-2), "h mismatch (bf16)"
    assert jnp.allclose(c_new, c_ref, atol=2e-2, rtol=2e-2), "c mismatch (bf16)"

    # Full-f32 MXU path (tighter structural check of the kernel).
    prep_f32 = prepare_trace_lstm_params(params, mxu_dtype=jnp.float32)
    h_f32, c_f32 = trace_lstm_cell(x, h, c, prep_f32)
    jax.block_until_ready((h_f32, c_f32))
    assert jnp.allclose(h_f32, h_ref, atol=5e-3, rtol=5e-3), "h mismatch (f32)"
    assert jnp.allclose(c_f32, c_ref, atol=5e-3, rtol=5e-3), "c mismatch (f32)"

    print("KERNEL_OK")
</pallas_src>

<mosaic_0001>
module attributes {stable_mosaic.version = 11 : i64} {
  func.func @kernel(%arg0: i32, %arg1: memref<8x64xf32, #tpu.memory_space<vmem>>, %arg2: memref<8x128xf32, #tpu.memory_space<vmem>>, %arg3: memref<8x128xf32, #tpu.memory_space<vmem>>, %arg4: memref<64x512xbf16, #tpu.memory_space<vmem>>, %arg5: memref<128x512xbf16, #tpu.memory_space<vmem>>, %arg6: memref<128x256xf32, #tpu.memory_space<vmem>>, %arg7: memref<128x128xf32, #tpu.memory_space<vmem>>, %arg8: memref<1x512xf32, #tpu.memory_space<vmem>>, %arg9: memref<8x128xf32, #tpu.memory_space<vmem>>, %arg10: memref<8x128xf32, #tpu.memory_space<vmem>>) attributes {dimension_semantics = [#tpu.dimension_semantics<parallel>], iteration_bounds = array<i64: 2>, scalar_prefetch = 0 : i64, scratch_operands = 0 : i64, tpu.core_type = #tpu.core_type<tc>, window_params = [{transform_indices = @transform_0, window_bounds = array<i64: 8, 64>}, {transform_indices = @transform_1, window_bounds = array<i64: 8, 128>}, {transform_indices = @transform_2, window_bounds = array<i64: 8, 128>}, {pipeline_mode = #tpu.pipeline_mode<synchronous>, transform_indices = @transform_3, window_bounds = array<i64: 64, 512>}, {pipeline_mode = #tpu.pipeline_mode<synchronous>, transform_indices = @transform_4, window_bounds = array<i64: 128, 512>}, {pipeline_mode = #tpu.pipeline_mode<synchronous>, transform_indices = @transform_5, window_bounds = array<i64: 128, 256>}, {pipeline_mode = #tpu.pipeline_mode<synchronous>, transform_indices = @transform_6, window_bounds = array<i64: 128, 128>}, {pipeline_mode = #tpu.pipeline_mode<synchronous>, transform_indices = @transform_7, window_bounds = array<i64: 1, 512>}, {transform_indices = @transform_8, window_bounds = array<i64: 8, 128>}, {transform_indices = @transform_9, window_bounds = array<i64: 8, 128>}]} {
    %c0 = arith.constant 0 : index
    %c0_0 = arith.constant 0 : index
    %0 = vector.load %arg4[%c0, %c0_0] : memref<64x512xbf16, #tpu.memory_space<vmem>>, vector<64x512xbf16>
    %c0_1 = arith.constant 0 : index
    %c0_2 = arith.constant 0 : index
    %1 = vector.load %arg5[%c0_1, %c0_2] : memref<128x512xbf16, #tpu.memory_space<vmem>>, vector<128x512xbf16>
    %c0_3 = arith.constant 0 : index
    %c0_4 = arith.constant 0 : index
    %2 = vector.load %arg6[%c0_3, %c0_4] : memref<128x256xf32, #tpu.memory_space<vmem>>, vector<128x256xf32>
    %c0_5 = arith.constant 0 : index
    %c0_6 = arith.constant 0 : index
    %3 = vector.load %arg7[%c0_5, %c0_6] : memref<128x128xf32, #tpu.memory_space<vmem>>, vector<128x128xf32>
    %c0_7 = arith.constant 0 : index
    %c0_8 = arith.constant 0 : index
    %4 = vector.load %arg8[%c0_7, %c0_8] : memref<1x512xf32, #tpu.memory_space<vmem>>, vector<1x512xf32>
    %c0_9 = arith.constant 0 : index
    %c0_10 = arith.constant 0 : index
    %5 = vector.load %arg1[%c0_9, %c0_10] : memref<8x64xf32, #tpu.memory_space<vmem>>, vector<8x64xf32>
    %6 = arith.truncf %5 : vector<8x64xf32> to vector<8x64xbf16>
    %c0_11 = arith.constant 0 : index
    %c0_12 = arith.constant 0 : index
    %7 = vector.load %arg2[%c0_11, %c0_12] : memref<8x128xf32, #tpu.memory_space<vmem>>, vector<8x128xf32>
    %8 = arith.truncf %7 : vector<8x128xf32> to vector<8x128xbf16>
    %c0_13 = arith.constant 0 : index
    %c0_14 = arith.constant 0 : index
    %9 = vector.load %arg3[%c0_13, %c0_14] : memref<8x128xf32, #tpu.memory_space<vmem>>, vector<8x128xf32>
    %cst = arith.constant dense<0.000000e+00> : vector<8x512xf32>
    %10 = tpu.matmul %6, %0, %cst {dimension_numbers = #tpu.dot_dimension_numbers<[1], [0], [0], [1], [0, 0, 1, 1], [], []>} : vector<8x64xbf16>, vector<64x512xbf16>, vector<8x512xf32> -> vector<8x512xf32>
    %cst_15 = arith.constant dense<0.000000e+00> : vector<8x512xf32>
    %11 = tpu.matmul %8, %1, %cst_15 {dimension_numbers = #tpu.dot_dimension_numbers<[1], [0], [0], [1], [0, 0, 1, 1], [], []>} : vector<8x128xbf16>, vector<128x512xbf16>, vector<8x512xf32> -> vector<8x512xf32>
    %12 = arith.addf %10, %11 : vector<8x512xf32>
    %13 = vector.broadcast %4 : vector<1x512xf32> to vector<8x512xf32>
    %14 = arith.addf %12, %13 : vector<8x512xf32>
    %cst_16 = arith.constant dense<0.000000e+00> : vector<8x256xf32>
    %15 = tpu.matmul %9, %2, %cst_16 {dimension_numbers = #tpu.dot_dimension_numbers<[1], [0], [0], [1], [0, 0, 1, 1], [], []>} : vector<8x128xf32>, vector<128x256xf32>, vector<8x256xf32> -> vector<8x256xf32>
    %16 = vector.extract_strided_slice %14 {offsets = [0, 0], sizes = [8, 128], strides = [1, 1]} : vector<8x512xf32> to vector<8x128xf32>
    %17 = vector.extract_strided_slice %15 {offsets = [0, 0], sizes = [8, 128], strides = [1, 1]} : vector<8x256xf32> to vector<8x128xf32>
    %18 = arith.addf %16, %17 : vector<8x128xf32>
    %cst_17 = arith.constant 5.000000e-01 : f32
    %19 = vector.broadcast %cst_17 : f32 to vector<8x128xf32>
    %20 = arith.mulf %19, %18 : vector<8x128xf32>
    %21 = math.tanh %20 : vector<8x128xf32>
    %cst_18 = arith.constant 1.000000e+00 : f32
    %22 = vector.broadcast %cst_18 : f32 to vector<8x128xf32>
    %23 = arith.addf %21, %22 : vector<8x128xf32>
    %cst_19 = arith.constant 5.000000e-01 : f32
    %24 = vector.broadcast %cst_19 : f32 to vector<8x128xf32>
    %25 = arith.mulf %24, %23 : vector<8x128xf32>
    %26 = vector.extract_strided_slice %14 {offsets = [0, 128], sizes = [8, 128], strides = [1, 1]} : vector<8x512xf32> to vector<8x128xf32>
    %27 = vector.extract_strided_slice %15 {offsets = [0, 128], sizes = [8, 128], strides = [1, 1]} : vector<8x256xf32> to vector<8x128xf32>
    %28 = arith.addf %26, %27 : vector<8x128xf32>
    %cst_20 = arith.constant 5.000000e-01 : f32
    %29 = vector.broadcast %cst_20 : f32 to vector<8x128xf32>
    %30 = arith.mulf %29, %28 : vector<8x128xf32>
    %31 = math.tanh %30 : vector<8x128xf32>
    %cst_21 = arith.constant 1.000000e+00 : f32
    %32 = vector.broadcast %cst_21 : f32 to vector<8x128xf32>
    %33 = arith.addf %31, %32 : vector<8x128xf32>
    %cst_22 = arith.constant 5.000000e-01 : f32
    %34 = vector.broadcast %cst_22 : f32 to vector<8x128xf32>
    %35 = arith.mulf %34, %33 : vector<8x128xf32>
    %36 = arith.mulf %25, %9 : vector<8x128xf32>
    %37 = vector.extract_strided_slice %14 {offsets = [0, 256], sizes = [8, 128], strides = [1, 1]} : vector<8x512xf32> to vector<8x128xf32>
    %38 = math.absf %37 : vector<8x128xf32>
    %cst_23 = arith.constant 1.000000e+00 : f32
    %39 = vector.broadcast %cst_23 : f32 to vector<8x128xf32>
    %40 = arith.addf %39, %38 : vector<8x128xf32>
    %41 = arith.divf %37, %40 : vector<8x128xf32>
    %42 = arith.mulf %35, %41 : vector<8x128xf32>
    %43 = arith.addf %36, %42 : vector<8x128xf32>
    %cst_24 = arith.constant dense<0.000000e+00> : vector<8x128xf32>
    %44 = tpu.matmul %43, %3, %cst_24 {dimension_numbers = #tpu.dot_dimension_numbers<[1], [0], [0], [1], [0, 0, 1, 1], [], []>} : vector<8x128xf32>, vector<128x128xf32>, vector<8x128xf32> -> vector<8x128xf32>
    %45 = vector.extract_strided_slice %14 {offsets = [0, 384], sizes = [8, 128], strides = [1, 1]} : vector<8x512xf32> to vector<8x128xf32>
    %46 = arith.addf %45, %44 : vector<8x128xf32>
    %cst_25 = arith.constant 5.000000e-01 : f32
    %47 = vector.broadcast %cst_25 : f32 to vector<8x128xf32>
    %48 = arith.mulf %47, %46 : vector<8x128xf32>
    %49 = math.tanh %48 : vector<8x128xf32>
    %cst_26 = arith.constant 1.000000e+00 : f32
    %50 = vector.broadcast %cst_26 : f32 to vector<8x128xf32>
    %51 = arith.addf %49, %50 : vector<8x128xf32>
    %cst_27 = arith.constant 5.000000e-01 : f32
    %52 = vector.broadcast %cst_27 : f32 to vector<8x128xf32>
    %53 = arith.mulf %52, %51 : vector<8x128xf32>
    %54 = math.absf %43 : vector<8x128xf32>
    %cst_28 = arith.constant 1.000000e+00 : f32
    %55 = vector.broadcast %cst_28 : f32 to vector<8x128xf32>
    %56 = arith.addf %55, %54 : vector<8x128xf32>
    %57 = tpu.reciprocal %56 {approx = true} : vector<8x128xf32> -> vector<8x128xf32>
    %58 = arith.mulf %43, %57 : vector<8x128xf32>
    %59 = arith.mulf %53, %58 : vector<8x128xf32>
    %c0_29 = arith.constant 0 : index
    %c0_30 = arith.constant 0 : index
    %60 = vector.load %arg9[%c0_29, %c0_30] : memref<8x128xf32, #tpu.memory_space<vmem>>, vector<8x128xf32>
    tpu.vector_store %arg9[%c0_29, %c0_30], %59 {strides = array<i32>} : memref<8x128xf32, #tpu.memory_space<vmem>>, vector<8x128xf32>,
    %c0_31 = arith.constant 0 : index
    %c0_32 = arith.constant 0 : index
    %61 = vector.load %arg10[%c0_31, %c0_32] : memref<8x128xf32, #tpu.memory_space<vmem>>, vector<8x128xf32>
    tpu.vector_store %arg10[%c0_31, %c0_32], %43 {strides = array<i32>} : memref<8x128xf32, #tpu.memory_space<vmem>>, vector<8x128xf32>,
    return
  }
  func.func @transform_0(%arg0: i32) -> (i32, i32) {
    %c0_i32 = arith.constant 0 : i32
    %c0_i32_0 = arith.constant 0 : i32
    return %arg0, %c0_i32 : i32, i32
  }
  func.func @transform_1(%arg0: i32) -> (i32, i32) {
    %c0_i32 = arith.constant 0 : i32
    %c0_i32_0 = arith.constant 0 : i32
    return %arg0, %c0_i32 : i32, i32
  }
  func.func @transform_2(%arg0: i32) -> (i32, i32) {
    %c0_i32 = arith.constant 0 : i32
    %c0_i32_0 = arith.constant 0 : i32
    return %arg0, %c0_i32 : i32, i32
  }
  func.func @transform_3(%arg0: i32) -> (i32, i32) {
    %c0_i32 = arith.constant 0 : i32
    %c0_i32_0 = arith.constant 0 : i32
    %c0_i32_1 = arith.constant 0 : i32
    return %c0_i32, %c0_i32_0 : i32, i32
  }
  func.func @transform_4(%arg0: i32) -> (i32, i32) {
    %c0_i32 = arith.constant 0 : i32
    %c0_i32_0 = arith.constant 0 : i32
    %c0_i32_1 = arith.constant 0 : i32
    return %c0_i32, %c0_i32_0 : i32, i32
  }
  func.func @transform_5(%arg0: i32) -> (i32, i32) {
    %c0_i32 = arith.constant 0 : i32
    %c0_i32_0 = arith.constant 0 : i32
    %c0_i32_1 = arith.constant 0 : i32
    return %c0_i32, %c0_i32_0 : i32, i32
  }
  func.func @transform_6(%arg0: i32) -> (i32, i32) {
    %c0_i32 = arith.constant 0 : i32
    %c0_i32_0 = arith.constant 0 : i32
    %c0_i32_1 = arith.constant 0 : i32
    return %c0_i32, %c0_i32_0 : i32, i32
  }
  func.func @transform_7(%arg0: i32) -> (i32, i32) {
    %c0_i32 = arith.constant 0 : i32
    %c0_i32_0 = arith.constant 0 : i32
    %c0_i32_1 = arith.constant 0 : i32
    return %c0_i32, %c0_i32_0 : i32, i32
  }
  func.func @transform_8(%arg0: i32) -> (i32, i32) {
    %c0_i32 = arith.constant 0 : i32
    %c0_i32_0 = arith.constant 0 : i32
    return %arg0, %c0_i32 : i32, i32
  }
  func.func @transform_9(%arg0: i32) -> (i32, i32) {
    %c0_i32 = arith.constant 0 : i32
    %c0_i32_0 = arith.constant 0 : i32
    return %arg0, %c0_i32 : i32, i32
  }
}

</mosaic_0001>

<llo_original>
// kernel: tpu_custom_call.1
$region0: #{tpu_custom_call.1}
  #allocation0 [shape = 'u32[]', space=smem, size = 0x4, offset = 0x4, fixed_abs, tag = 'smem constant byte address 0x4 - core index']
  #allocation1 [shape = 'u32[144,128]{1,0:T(1,128)}', space=vmem, size = 0x12000, scoped, tag = 'internal scratch']
  %s0 = inlined_call_operand.hbm [shape: f32[16,64], index: 0, kind: input, shape index: {}]
  %s1 = inlined_call_operand.hbm [shape: f32[16,128], index: 1, kind: input, shape index: {}]
  %s2 = inlined_call_operand.hbm [shape: f32[16,128], index: 2, kind: input, shape index: {}]
  %s3 = inlined_call_operand.hbm [shape: bf16[64,512], index: 3, kind: input, shape index: {}]
  %s4 = inlined_call_operand.hbm [shape: bf16[128,512], index: 4, kind: input, shape index: {}]
  %s5 = inlined_call_operand.hbm [shape: f32[128,256], index: 5, kind: input, shape index: {}]
  %s6 = inlined_call_operand.hbm [shape: f32[128,128], index: 6, kind: input, shape index: {}]
  %s7 = inlined_call_operand.vmem [shape: f32[1,512], index: 7, kind: input, shape index: {}]
  %s8 = inlined_call_operand.hbm [shape: f32[16,128], index: 8, kind: output, shape index: {0}]
  %s9 = inlined_call_operand.hbm [shape: f32[16,128], index: 9, kind: output, shape index: {1}]
  %10 = xla_tuple %s8, %s9
  %s11 = sld [smem:[#allocation0]]
  $region101: #{tpu_custom_call.1} parent=0
    _
  %s13 = ssub.s32 1, %s11
  %s14 = scalar_select 0, %s13, %s11
  $region1: #{tpu_custom_call.1} parent=0
    #allocation2 [shape = 'u8[8192]{0}', space=vmem, size = 0x2000, scoped, tag = 'input window, operand 0']
    #allocation3 [shape = 's32[2]{0}', space=sflag, size = 0x8, scoped, tag = 'scoped memory for tpu_custom_call.1']
    #allocation4 [shape = 's32[2]{0}', space=sflag, size = 0x8, scoped, tag = 'scoped memory for tpu_custom_call.1']
    #allocation5 [shape = 'u8[8192]{0}', space=vmem, size = 0x2000, scoped, tag = 'input window, operand 1']
    #allocation6 [shape = 's32[2]{0}', space=sflag, size = 0x8, scoped, tag = 'scoped memory for tpu_custom_call.1']
    #allocation7 [shape = 'u8[8192]{0}', space=vmem, size = 0x2000, scoped, tag = 'input window, operand 2']
    #allocation8 [shape = 'u8[65536]{0}', space=vmem, size = 0x10000, scoped, tag = 'input window, operand 3, single buffered']
    #allocation9 [shape = 's32[1]{0}', space=sflag, size = 0x4, scoped, tag = 'scoped memory for tpu_custom_call.1']
    #allocation10 [shape = 'u8[131072]{0}', space=vmem, size = 0x20000, scoped, tag = 'input window, operand 4, single buffered']
    #allocation11 [shape = 'u8[131072]{0}', space=vmem, size = 0x20000, scoped, tag = 'input window, operand 5, single buffered']
    #allocation12 [shape = 's32[1]{0}', space=sflag, size = 0x4, scoped, tag = 'scoped memory for tpu_custom_call.1']
    #allocation13 [shape = 'u8[65536]{0}', space=vmem, size = 0x10000, scoped, tag = 'input window, operand 6, single buffered']
    #allocation14 [shape = 'u8[8192]{0}', space=vmem, size = 0x2000, scoped, tag = 'output window, operand 0']
    #allocation15 [shape = 'u8[8192]{0}', space=vmem, size = 0x2000, scoped, tag = 'output window, operand 1']
    #allocation16 [shape = 's32[2]{0}', space=sflag, size = 0x8, scoped, tag = 'scoped memory for tpu_custom_call.1']
    %15 = vsyncpa [#allocation3], 0
    %s16 = scalar_lea.sflag [#allocation3], 1
    %17 = vsyncpa %s16, 0
    %18 = vsyncpa [#allocation6], 0
    %s19 = scalar_lea.sflag [#allocation6], 1
    %20 = vsyncpa %s19, 0
    %21 = vsyncpa [#allocation9], 0
    %22 = vsyncpa [#allocation12], 0
    %23 = vsyncpa [#allocation4], 0
    %s24 = scalar_lea.sflag [#allocation4], 1
    %25 = vsyncpa %s24, 0
    %26 = vsyncpa [#allocation16], 0
    %s27 = scalar_lea.sflag [#allocation16], 1
    %28 = vsyncpa %s27, 0
    loop: start=0, step=1, limit=4
    $region2: #{tpu_custom_call.1} parent=1 // loop_pre_header
      _
    $region3: #{tpu_custom_call.1} parent=1 // loop_header
      %s30 = sphi 0, %s34
      %p31 = scmp.ge.s32.totalorder %s30, 4
      %s40 = sphi 0, %s42
      %s43 = sphi 0, %s40
      %s44 = sphi 0, %s43
      %s60 = sphi 0, %s44
      %s66 = sphi 0, %s68
      %s69 = sphi 0, %s66
      %s70 = sphi 0, %s69
      %s86 = sphi 0, %s70
      %s92 = sphi 0, %s94
      %s95 = sphi 0, %s92
      %s96 = sphi 0, %s95
      %s112 = sphi 0, %s96
      %s116 = sphi 0, %s116
      %s118 = sphi 0, %s116
      %s119 = sphi 0, %s118
      %s133 = sphi 0, %s119
      %s137 = sphi 0, %s137
      %s139 = sphi 0, %s137
      %s140 = sphi 0, %s139
      %s154 = sphi 0, %s140
      %s158 = sphi 0, %s158
      %s160 = sphi 0, %s158
      %s161 = sphi 0, %s160
      %s175 = sphi 0, %s161
      %s179 = sphi 0, %s179
      %s181 = sphi 0, %s179
      %s182 = sphi 0, %s181
      %s196 = sphi 0, %s182
      %s200 = sphi 0, %s200
      %s202 = sphi 0, %s200
      %s203 = sphi 0, %s202
      %s217 = sphi 0, %s203
      %s223 = sphi 0, %s225
      %s226 = sphi 0, %s223
      %s227 = sphi 0, %s226
      %s243 = sphi 0, %s227
      %s249 = sphi 0, %s251
      %s252 = sphi 0, %s249
      %s253 = sphi 0, %s252
      %s269 = sphi 0, %s253
    $region4: #{tpu_custom_call.1} parent=1 // loop_header_branch
      %33 = sbr.rel (%p31) target = $region8
    $region5: #{tpu_custom_call.1} parent=1 // loop_body
      %s35 = ssub.s32 %s30, 1
      %s36 = ssub.s32 %s30, 2
      %s37 = sadd.s32 %s30, 1
      %s38 = ssub.s32 %s30, %s37
      %p39 = scmp.eq.s32.totalorder %s38, 0
      %s41 = sadd.s32 %s40, 1
      %s42 = scalar_select %p39, %s40, %s41
      %p45 = pneg %p39
      %p46 = scmp.eq.s32.totalorder %s30, 1
      %p47 = por %p45, %p46
      %p48 = scmp.ne.s32.totalorder %s40, %s43
      %p49 = scmp.eq.s32.totalorder %s30, 0
      %p50 = por %p48, %p49
      %p51 = scmp.ne.s32.totalorder %s40, %s43
      %p52 = scmp.eq.s32.totalorder %s35, 1
      %p53 = por %p51, %p52
      %p54 = scmp.ne.s32.totalorder %s43, %s44
      %p55 = scmp.eq.s32.totalorder %s35, 0
      %p56 = por %p54, %p55
      %p57 = scmp.ne.s32.totalorder %s43, %s44
      %p58 = scmp.eq.s32.totalorder %s36, 1
      %p59 = por %p57, %p58
      %p61 = scmp.ne.s32.totalorder %s44, %s60
      %p62 = scmp.eq.s32.totalorder %s36, 0
      %p63 = por %p61, %p62
      %s64 = ssub.s32 %s30, %s37
      %p65 = scmp.eq.s32.totalorder %s64, 0
      %s67 = sadd.s32 %s66, 1
      %s68 = scalar_select %p65, %s66, %s67
      %p71 = pneg %p65
      %p72 = scmp.eq.s32.totalorder %s30, 1
      %p73 = por %p71, %p72
      %p74 = scmp.ne.s32.totalorder %s66, %s69
      %p75 = scmp.eq.s32.totalorder %s30, 0
      %p76 = por %p74, %p75
      %p77 = scmp.ne.s32.totalorder %s66, %s69
      %p78 = scmp.eq.s32.totalorder %s35, 1
      %p79 = por %p77, %p78
      %p80 = scmp.ne.s32.totalorder %s69, %s70
      %p81 = scmp.eq.s32.totalorder %s35, 0
      %p82 = por %p80, %p81
      %p83 = scmp.ne.s32.totalorder %s69, %s70
      %p84 = scmp.eq.s32.totalorder %s36, 1
      %p85 = por %p83, %p84
      %p87 = scmp.ne.s32.totalorder %s70, %s86
      %p88 = scmp.eq.s32.totalorder %s36, 0
      %p89 = por %p87, %p88
      %s90 = ssub.s32 %s30, %s37
      %p91 = scmp.eq.s32.totalorder %s90, 0
      %s93 = sadd.s32 %s92, 1
      %s94 = scalar_select %p91, %s92, %s93
      %p97 = pneg %p91
      %p98 = scmp.eq.s32.totalorder %s30, 1
      %p99 = por %p97, %p98
      %p100 = scmp.ne.s32.totalorder %s92, %s95
      %p101 = scmp.eq.s32.totalorder %s30, 0
      %p102 = por %p100, %p101
      %p103 = scmp.ne.s32.totalorder %s92, %s95
      %p104 = scmp.eq.s32.totalorder %s35, 1
      %p105 = por %p103, %p104
      %p106 = scmp.ne.s32.totalorder %s95, %s96
      %p107 = scmp.eq.s32.totalorder %s35, 0
      %p108 = por %p106, %p107
      %p109 = scmp.ne.s32.totalorder %s95, %s96
      %p110 = scmp.eq.s32.totalorder %s36, 1
      %p111 = por %p109, %p110
      %p113 = scmp.ne.s32.totalorder %s96, %s112
      %p114 = scmp.eq.s32.totalorder %s36, 0
      %p115 = por %p113, %p114
      %s117 = sadd.s32 %s116, 1
      %p120 = scmp.eq.s32.totalorder %s30, 1
      %p121 = scmp.ne.s32.totalorder %s116, %s118
      %p122 = scmp.eq.s32.totalorder %s30, 0
      %p123 = por %p121, %p122
      %p124 = scmp.ne.s32.totalorder %s116, %s118
      %p125 = scmp.eq.s32.totalorder %s35, 1
      %p126 = por %p124, %p125
      %p127 = scmp.ne.s32.totalorder %s118, %s119
      %p128 = scmp.eq.s32.totalorder %s35, 0
      %p129 = por %p127, %p128
      %p130 = scmp.ne.s32.totalorder %s118, %s119
      %p131 = scmp.eq.s32.totalorder %s36, 1
      %p132 = por %p130, %p131
      %p134 = scmp.ne.s32.totalorder %s119, %s133
      %p135 = scmp.eq.s32.totalorder %s36, 0
      %p136 = por %p134, %p135
      %s138 = sadd.s32 %s137, 1
      %p141 = scmp.eq.s32.totalorder %s30, 1
      %p142 = scmp.ne.s32.totalorder %s137, %s139
      %p143 = scmp.eq.s32.totalorder %s30, 0
      %p144 = por %p142, %p143
      %p145 = scmp.ne.s32.totalorder %s137, %s139
      %p146 = scmp.eq.s32.totalorder %s35, 1
      %p147 = por %p145, %p146
      %p148 = scmp.ne.s32.totalorder %s139, %s140
      %p149 = scmp.eq.s32.totalorder %s35, 0
      %p150 = por %p148, %p149
      %p151 = scmp.ne.s32.totalorder %s139, %s140
      %p152 = scmp.eq.s32.totalorder %s36, 1
      %p153 = por %p151, %p152
      %p155 = scmp.ne.s32.totalorder %s140, %s154
      %p156 = scmp.eq.s32.totalorder %s36, 0
      %p157 = por %p155, %p156
      %s159 = sadd.s32 %s158, 1
      %p162 = scmp.eq.s32.totalorder %s30, 1
      %p163 = scmp.ne.s32.totalorder %s158, %s160
      %p164 = scmp.eq.s32.totalorder %s30, 0
      %p165 = por %p163, %p164
      %p166 = scmp.ne.s32.totalorder %s158, %s160
      %p167 = scmp.eq.s32.totalorder %s35, 1
      %p168 = por %p166, %p167
      %p169 = scmp.ne.s32.totalorder %s160, %s161
      %p170 = scmp.eq.s32.totalorder %s35, 0
      %p171 = por %p169, %p170
      %p172 = scmp.ne.s32.totalorder %s160, %s161
      %p173 = scmp.eq.s32.totalorder %s36, 1
      %p174 = por %p172, %p173
      %p176 = scmp.ne.s32.totalorder %s161, %s175
      %p177 = scmp.eq.s32.totalorder %s36, 0
      %p178 = por %p176, %p177
      %s180 = sadd.s32 %s179, 1
      %p183 = scmp.eq.s32.totalorder %s30, 1
      %p184 = scmp.ne.s32.totalorder %s179, %s181
      %p185 = scmp.eq.s32.totalorder %s30, 0
      %p186 = por %p184, %p185
      %p187 = scmp.ne.s32.totalorder %s179, %s181
      %p188 = scmp.eq.s32.totalorder %s35, 1
      %p189 = por %p187, %p188
      %p190 = scmp.ne.s32.totalorder %s181, %s182
      %p191 = scmp.eq.s32.totalorder %s35, 0
      %p192 = por %p190, %p191
      %p193 = scmp.ne.s32.totalorder %s181, %s182
      %p194 = scmp.eq.s32.totalorder %s36, 1
      %p195 = por %p193, %p194
      %p197 = scmp.ne.s32.totalorder %s182, %s196
      %p198 = scmp.eq.s32.totalorder %s36, 0
      %p199 = por %p197, %p198
      %s201 = sadd.s32 %s200, 1
      %p204 = scmp.eq.s32.totalorder %s30, 1
      %p205 = scmp.ne.s32.totalorder %s200, %s202
      %p206 = scmp.eq.s32.totalorder %s30, 0
      %p207 = por %p205, %p206
      %p208 = scmp.ne.s32.totalorder %s200, %s202
      %p209 = scmp.eq.s32.totalorder %s35, 1
      %p210 = por %p208, %p209
      %p211 = scmp.ne.s32.totalorder %s202, %s203
      %p212 = scmp.eq.s32.totalorder %s35, 0
      %p213 = por %p211, %p212
      %p214 = scmp.ne.s32.totalorder %s202, %s203
      %p215 = scmp.eq.s32.totalorder %s36, 1
      %p216 = por %p214, %p215
      %p218 = scmp.ne.s32.totalorder %s203, %s217
      %p219 = scmp.eq.s32.totalorder %s36, 0
      %p220 = por %p218, %p219
      %s221 = ssub.s32 %s30, %s37
      %p222 = scmp.eq.s32.totalorder %s221, 0
      %s224 = sadd.s32 %s223, 1
      %s225 = scalar_select %p222, %s223, %s224
      %p228 = pneg %p222
      %p229 = scmp.eq.s32.totalorder %s30, 1
      %p230 = por %p228, %p229
      %p231 = scmp.ne.s32.totalorder %s223, %s226
      %p232 = scmp.eq.s32.totalorder %s30, 0
      %p233 = por %p231, %p232
      %p234 = scmp.ne.s32.totalorder %s223, %s226
      %p235 = scmp.eq.s32.totalorder %s35, 1
      %p236 = por %p234, %p235
      %p237 = scmp.ne.s32.totalorder %s226, %s227
      %p238 = scmp.eq.s32.totalorder %s35, 0
      %p239 = por %p237, %p238
      %p240 = scmp.ne.s32.totalorder %s226, %s227
      %p241 = scmp.eq.s32.totalorder %s36, 1
      %p242 = por %p240, %p241
      %p244 = scmp.ne.s32.totalorder %s227, %s243
      %p245 = scmp.eq.s32.totalorder %s36, 0
      %p246 = por %p244, %p245
      %s247 = ssub.s32 %s30, %s37
      %p248 = scmp.eq.s32.totalorder %s247, 0
      %s250 = sadd.s32 %s249, 1
      %s251 = scalar_select %p248, %s249, %s250
      %p254 = pneg %p248
      %p255 = scmp.eq.s32.totalorder %s30, 1
      %p256 = por %p254, %p255
      %p257 = scmp.ne.s32.totalorder %s249, %s252
      %p258 = scmp.eq.s32.totalorder %s30, 0
      %p259 = por %p257, %p258
      %p260 = scmp.ne.s32.totalorder %s249, %s252
      %p261 = scmp.eq.s32.totalorder %s35, 1
      %p262 = por %p260, %p261
      %p263 = scmp.ne.s32.totalorder %s252, %s253
      %p264 = scmp.eq.s32.totalorder %s35, 0
      %p265 = por %p263, %p264
      %p266 = scmp.ne.s32.totalorder %s252, %s253
      %p267 = scmp.eq.s32.totalorder %s36, 1
      %p268 = por %p266, %p267
      %p270 = scmp.ne.s32.totalorder %s253, %s269
      %p271 = scmp.eq.s32.totalorder %s36, 0
      %p272 = por %p270, %p271
      %p273 = scmp.le.s32.totalorder 1, %s30
      %p274 = scmp.lt.s32.totalorder %s30, 3
      %p275 = pnand %p273, %p274
      %p276 = pneg %p275
      // Predicated region
      $region9: #{tpu_custom_call.1} parent=5 // pred_check
        _
      $region10: #{tpu_custom_call.1} parent=5 // pred_check_branch
        %278 = sbr.rel (%p275) target = $region12
      $region11: #{tpu_custom_call.1} parent=5 // pred_region
        %s279 = ssub.s32 %s30, 1
        // Predicated region
        $region13: #{tpu_custom_call.1} parent=11 // pred_check
          %p280 = pneg %p129
        $region14: #{tpu_custom_call.1} parent=11 // pred_check_branch
          %282 = sbr.rel (%p280) target = $region16
        $region15: #{tpu_custom_call.1} parent=11 // pred_region
          %s284 = ssub.s32 2048, 2048
          %285 = vsyncadd [#allocation9], %s284
          %s286 = sshll.u32 [#allocation8], 4
          %s287 = int_to_ptr.vmem [resolvable:$true] %s286
          %292 = dma.hbm_to_vmem [thread:$0]  %s3, 2048, %s287, [#allocation9], 256, 256, 16
        $region16: #{tpu_custom_call.1} parent=11 // pred_fallthru
          _
        // Predicated region
        $region17: #{tpu_custom_call.1} parent=11 // pred_check
          %p293 = pneg %p150
        $region18: #{tpu_custom_call.1} parent=11 // pred_check_branch
          %295 = sbr.rel (%p293) target = $region20
        $region19: #{tpu_custom_call.1} parent=11 // pred_region
          %s297 = ssub.s32 4096, 4096
          %298 = vsyncadd [#allocation9], %s297
          %s299 = sshll.u32 [#allocation10], 4
          %s300 = int_to_ptr.vmem [resolvable:$true] %s299
          %305 = dma.hbm_to_vmem [thread:$0]  %s4, 4096, %s300, [#allocation9], 256, 256, 16
        $region20: #{tpu_custom_call.1} parent=11 // pred_fallthru
          _
        // Predicated region
        $region21: #{tpu_custom_call.1} parent=11 // pred_check
          %p306 = pneg %p171
        $region22: #{tpu_custom_call.1} parent=11 // pred_check_branch
          %308 = sbr.rel (%p306) target = $region24
        $region23: #{tpu_custom_call.1} parent=11 // pred_region
          %s310 = ssub.s32 4096, 4096
          %311 = vsyncadd [#allocation12], %s310
          %s312 = sshll.u32 [#allocation11], 4
          %s313 = int_to_ptr.vmem [resolvable:$true] %s312
          %318 = dma.hbm_to_vmem [thread:$0]  %s5, 4096, %s313, [#allocation12], 256, 256, 16
        $region24: #{tpu_custom_call.1} parent=11 // pred_fallthru
          _
        // Predicated region
        $region25: #{tpu_custom_call.1} parent=11 // pred_check
          %p319 = pneg %p192
        $region26: #{tpu_custom_call.1} parent=11 // pred_check_branch
          %321 = sbr.rel (%p319) target = $region28
        $region27: #{tpu_custom_call.1} parent=11 // pred_region
          %s323 = ssub.s32 2048, 2048
          %324 = vsyncadd [#allocation12], %s323
          %s325 = sshll.u32 [#allocation13], 4
          %s326 = int_to_ptr.vmem [resolvable:$true] %s325
          %331 = dma.hbm_to_vmem [thread:$0]  %s6, 2048, %s326, [#allocation12], 128, 128, 8
        $region28: #{tpu_custom_call.1} parent=11 // pred_fallthru
          _
        // Predicated region
        $region29: #{tpu_custom_call.1} parent=11 // pred_check
          %p332 = pneg %p213
        $region30: #{tpu_custom_call.1} parent=11 // pred_check_branch
          %334 = sbr.rel (%p332) target = $region32
        $region31: #{tpu_custom_call.1} parent=11 // pred_region
          _
        $region32: #{tpu_custom_call.1} parent=11 // pred_fallthru
          _
      $region12: #{tpu_custom_call.1} parent=5 // pred_fallthru
        _
      %p335 = scmp.lt.s32.totalorder %s30, 2
      // Predicated region
      $region33: #{tpu_custom_call.1} parent=5 // pred_check
        %p336 = pneg %p335
      $region34: #{tpu_custom_call.1} parent=5 // pred_check_branch
        %338 = sbr.rel (%p336) target = $region36
      $region35: #{tpu_custom_call.1} parent=5 // pred_region
        // Predicated region
        $region37: #{tpu_custom_call.1} parent=35 // pred_check
          %p339 = pneg %p50
        $region38: #{tpu_custom_call.1} parent=35 // pred_check_branch
          %341 = sbr.rel (%p339) target = $region40
        $region39: #{tpu_custom_call.1} parent=35 // pred_region
          %s342 = sand.u32 %s40, 1
          %s343 = scalar_lea.sflag [#allocation3], %s342
          %s344 = sand.u32 %s40, 1
          %s345 = smul.addr %s344, 8
          %s346 = scalar_lea.vmem [#allocation2], %s345
          %s348 = ssub.s32 128, 128
          %349 = vsyncadd %s343, %s348
          %s350 = smul.addr %s30, 128
          %s351 = scalar_lea.hbm %s0, %s350
          %s353 = sshll.u32 %s346, 4
          %s354 = int_to_ptr.vmem [resolvable:$true] %s353
          %356 = dma.hbm_to_vmem [thread:$0]  %s351, 128, %s354, %s343
        $region40: #{tpu_custom_call.1} parent=35 // pred_fallthru
          _
        // Predicated region
        $region41: #{tpu_custom_call.1} parent=35 // pred_check
          %p357 = pneg %p76
        $region42: #{tpu_custom_call.1} parent=35 // pred_check_branch
          %359 = sbr.rel (%p357) target = $region44
        $region43: #{tpu_custom_call.1} parent=35 // pred_region
          %s360 = sand.u32 %s30, 1
          %s361 = scalar_lea.sflag [#allocation6], %s360
          %s362 = sand.u32 %s66, 1
          %s363 = smul.addr %s362, 8
          %s364 = scalar_lea.vmem [#allocation5], %s363
          %s366 = ssub.s32 128, 128
          %367 = vsyncadd %s361, %s366
          %s368 = smul.addr %s30, 128
          %s369 = scalar_lea.hbm %s1, %s368
          %s371 = sshll.u32 %s364, 4
          %s372 = int_to_ptr.vmem [resolvable:$true] %s371
          %374 = dma.hbm_to_vmem [thread:$0]  %s369, 128, %s372, %s361
        $region44: #{tpu_custom_call.1} parent=35 // pred_fallthru
          _
        // Predicated region
        $region45: #{tpu_custom_call.1} parent=35 // pred_check
          %p375 = pneg %p102
        $region46: #{tpu_custom_call.1} parent=35 // pred_check_branch
          %377 = sbr.rel (%p375) target = $region48
        $region47: #{tpu_custom_call.1} parent=35 // pred_region
          %s378 = sand.u32 %s30, 1
          %s379 = scalar_lea.sflag [#allocation6], %s378
          %s380 = sand.u32 %s92, 1
          %s381 = smul.addr %s380, 8
          %s382 = scalar_lea.vmem [#allocation7], %s381
          %s384 = ssub.s32 128, 128
          %385 = vsyncadd %s379, %s384
          %s386 = smul.addr %s30, 128
          %s387 = scalar_lea.hbm %s2, %s386
          %s389 = sshll.u32 %s382, 4
          %s390 = int_to_ptr.vmem [resolvable:$true] %s389
          %392 = dma.hbm_to_vmem [thread:$0]  %s387, 128, %s390, %s379
        $region48: #{tpu_custom_call.1} parent=35 // pred_fallthru
          _
      $region36: #{tpu_custom_call.1} parent=5 // pred_fallthru
        _
      %p393 = scmp.le.s32.totalorder 1, %s30
      %p394 = scmp.lt.s32.totalorder %s30, 3
      %p395 = pnand %p393, %p394
      %p396 = pneg %p395
      // Predicated region
      $region49: #{tpu_custom_call.1} parent=5 // pred_check
        _
      $region50: #{tpu_custom_call.1} parent=5 // pred_check_branch
        %398 = sbr.rel (%p395) target = $region52
      $region51: #{tpu_custom_call.1} parent=5 // pred_region
        %s399 = ssub.s32 %s30, 1
        %s400 = sand.u32 %s43, 1
        %s401 = scalar_lea.sflag [#allocation3], %s400
        %s402 = sand.u32 %s43, 1
        %s403 = smul.addr %s402, 8
        %s404 = scalar_lea.vmem [#allocation2], %s403
        // Predicated region
        $region53: #{tpu_custom_call.1} parent=51 // pred_check
          %p405 = pneg %p56
        $region54: #{tpu_custom_call.1} parent=51 // pred_check_branch
          %407 = sbr.rel (%p405) target = $region56
        $region55: #{tpu_custom_call.1} parent=51 // pred_region
          %408 = dma.done %s401, 128
        $region56: #{tpu_custom_call.1} parent=51 // pred_fallthru
          _
        %s409 = sand.u32 %s35, 1
        %s410 = scalar_lea.sflag [#allocation6], %s409
        %s411 = sand.u32 %s69, 1
        %s412 = smul.addr %s411, 8
        %s413 = scalar_lea.vmem [#allocation5], %s412
        // Predicated region
        $region57: #{tpu_custom_call.1} parent=51 // pred_check
          %p414 = pneg %p82
        $region58: #{tpu_custom_call.1} parent=51 // pred_check_branch
          %416 = sbr.rel (%p414) target = $region60
        $region59: #{tpu_custom_call.1} parent=51 // pred_region
          %417 = dma.done %s410, 128
        $region60: #{tpu_custom_call.1} parent=51 // pred_fallthru
          _
        %s418 = sand.u32 %s35, 1
        %s419 = scalar_lea.sflag [#allocation6], %s418
        %s420 = sand.u32 %s95, 1
        %s421 = smul.addr %s420, 8
        %s422 = scalar_lea.vmem [#allocation7], %s421
        // Predicated region
        $region61: #{tpu_custom_call.1} parent=51 // pred_check
          %p423 = pneg %p108
        $region62: #{tpu_custom_call.1} parent=51 // pred_check_branch
          %425 = sbr.rel (%p423) target = $region64
        $region63: #{tpu_custom_call.1} parent=51 // pred_region
          %426 = dma.done %s419, 128
        $region64: #{tpu_custom_call.1} parent=51 // pred_fallthru
          _
        // Predicated region
        $region65: #{tpu_custom_call.1} parent=51 // pred_check
          %p427 = pneg %p129
        $region66: #{tpu_custom_call.1} parent=51 // pred_check_branch
          %429 = sbr.rel (%p427) target = $region68
        $region67: #{tpu_custom_call.1} parent=51 // pred_region
          %430 = dma.done [#allocation9], 2048
        $region68: #{tpu_custom_call.1} parent=51 // pred_fallthru
          _
        // Predicated region
        $region69: #{tpu_custom_call.1} parent=51 // pred_check
          %p431 = pneg %p150
        $region70: #{tpu_custom_call.1} parent=51 // pred_check_branch
          %433 = sbr.rel (%p431) target = $region72
        $region71: #{tpu_custom_call.1} parent=51 // pred_region
          %434 = dma.done [#allocation9], 4096
        $region72: #{tpu_custom_call.1} parent=51 // pred_fallthru
          _
        // Predicated region
        $region73: #{tpu_custom_call.1} parent=51 // pred_check
          %p435 = pneg %p171
        $region74: #{tpu_custom_call.1} parent=51 // pred_check_branch
          %437 = sbr.rel (%p435) target = $region76
        $region75: #{tpu_custom_call.1} parent=51 // pred_region
          %438 = dma.done [#allocation12], 4096
        $region76: #{tpu_custom_call.1} parent=51 // pred_fallthru
          _
        // Predicated region
        $region77: #{tpu_custom_call.1} parent=51 // pred_check
          %p439 = pneg %p192
        $region78: #{tpu_custom_call.1} parent=51 // pred_check_branch
          %441 = sbr.rel (%p439) target = $region80
        $region79: #{tpu_custom_call.1} parent=51 // pred_region
          %442 = dma.done [#allocation12], 2048
        $region80: #{tpu_custom_call.1} parent=51 // pred_fallthru
          _
        %s443 = sand.u32 %s43, 1
        %s444 = scalar_lea.sflag [#allocation3], %s443
        %s445 = sand.u32 %s43, 1
        %s446 = smul.addr %s445, 8
        %s447 = scalar_lea.vmem [#allocation2], %s446
        %p448 = pneg %p56
        %p449 = pneg %p53
        %s450 = sand.u32 %s35, 1
        %s451 = scalar_lea.sflag [#allocation6], %s450
        %s452 = sand.u32 %s69, 1
        %s453 = smul.addr %s452, 8
        %s454 = scalar_lea.vmem [#allocation5], %s453
        %p455 = pneg %p82
        %p456 = pneg %p79
        %s457 = sand.u32 %s35, 1
        %s458 = scalar_lea.sflag [#allocation6], %s457
        %s459 = sand.u32 %s95, 1
        %s460 = smul.addr %s459, 8
        %s461 = scalar_lea.vmem [#allocation7], %s460
        %p462 = pneg %p108
        %p463 = pneg %p105
        %p464 = pneg %p129
        %p465 = pneg %p126
        %p466 = pneg %p150
        %p467 = pneg %p147
        %p468 = pneg %p171
        %p469 = pneg %p168
        %p470 = pneg %p192
        %p471 = pneg %p189
        %p472 = pneg %p213
        %p473 = pneg %p210
        %p474 = pneg %p239
        %p475 = pneg %p236
        %s476 = sand.u32 %s226, 1
        %s477 = scalar_lea.sflag [#allocation4], %s476
        %s478 = sand.u32 %s226, 1
        %s479 = smul.addr %s478, 8
        %s480 = scalar_lea.vmem [#allocation14], %s479
        %p481 = pneg %p265
        %p482 = pneg %p262
        %s483 = sand.u32 %s252, 1
        %s484 = scalar_lea.sflag [#allocation16], %s483
        %s485 = sand.u32 %s252, 1
        %s486 = smul.addr %s485, 8
        %s487 = scalar_lea.vmem [#allocation15], %s486
        %v489 = vld [vmem:[#allocation8] sm:$0xff]
        %v490 = vld [vmem:[#allocation8 + $0x8] sm:$0xff]
        %v491 = vld [vmem:[#allocation8 + $0x10] sm:$0xff]
        %v492 = vld [vmem:[#allocation8 + $0x18] sm:$0xff]
        %v493 = vld [vmem:[#allocation8 + $0x20] sm:$0xff]
        %v494 = vld [vmem:[#allocation8 + $0x28] sm:$0xff]
        %v495 = vld [vmem:[#allocation8 + $0x30] sm:$0xff]
        %v496 = vld [vmem:[#allocation8 + $0x38] sm:$0xff]
        %v497 = vld [vmem:[#allocation8 + $0x40] sm:$0xff]
        %v498 = vld [vmem:[#allocation8 + $0x48] sm:$0xff]
        %v499 = vld [vmem:[#allocation8 + $0x50] sm:$0xff]
        %v500 = vld [vmem:[#allocation8 + $0x58] sm:$0xff]
        %v501 = vld [vmem:[#allocation8 + $0x60] sm:$0xff]
        %v502 = vld [vmem:[#allocation8 + $0x68] sm:$0xff]
        %v503 = vld [vmem:[#allocation8 + $0x70] sm:$0xff]
        %v504 = vld [vmem:[#allocation8 + $0x78] sm:$0xff]
        %v505 = vld [vmem:[#allocation10] sm:$0xff]
        %v506 = vld [vmem:[#allocation10 + $0x8] sm:$0xff]
        %v507 = vld [vmem:[#allocation10 + $0x10] sm:$0xff]
        %v508 = vld [vmem:[#allocation10 + $0x18] sm:$0xff]
        %v509 = vld [vmem:[#allocation10 + $0x20] sm:$0xff]
        %v510 = vld [vmem:[#allocation10 + $0x28] sm:$0xff]
        %v511 = vld [vmem:[#allocation10 + $0x30] sm:$0xff]
        %v512 = vld [vmem:[#allocation10 + $0x38] sm:$0xff]
        %v513 = vld [vmem:[#allocation10 + $0x40] sm:$0xff]
        %v514 = vld [vmem:[#allocation10 + $0x48] sm:$0xff]
        %v515 = vld [vmem:[#allocation10 + $0x50] sm:$0xff]
        %v516 = vld [vmem:[#allocation10 + $0x58] sm:$0xff]
        %v517 = vld [vmem:[#allocation10 + $0x60] sm:$0xff]
        %v518 = vld [vmem:[#allocation10 + $0x68] sm:$0xff]
        %v519 = vld [vmem:[#allocation10 + $0x70] sm:$0xff]
        %v520 = vld [vmem:[#allocation10 + $0x78] sm:$0xff]
        %v521 = vld [vmem:[#allocation10 + $0x80] sm:$0xff]
        %v522 = vld [vmem:[#allocation10 + $0x88] sm:$0xff]
        %v523 = vld [vmem:[#allocation10 + $0x90] sm:$0xff]
        %v524 = vld [vmem:[#allocation10 + $0x98] sm:$0xff]
        %v525 = vld [vmem:[#allocation10 + $0xa0] sm:$0xff]
        %v526 = vld [vmem:[#allocation10 + $0xa8] sm:$0xff]
        %v527 = vld [vmem:[#allocation10 + $0xb0] sm:$0xff]
        %v528 = vld [vmem:[#allocation10 + $0xb8] sm:$0xff]
        %v529 = vld [vmem:[#allocation10 + $0xc0] sm:$0xff]
        %v530 = vld [vmem:[#allocation10 + $0xc8] sm:$0xff]
        %v531 = vld [vmem:[#allocation10 + $0xd0] sm:$0xff]
        %v532 = vld [vmem:[#allocation10 + $0xd8] sm:$0xff]
        %v533 = vld [vmem:[#allocation10 + $0xe0] sm:$0xff]
        %v534 = vld [vmem:[#allocation10 + $0xe8] sm:$0xff]
        %v535 = vld [vmem:[#allocation10 + $0xf0] sm:$0xff]
        %v536 = vld [vmem:[#allocation10 + $0xf8] sm:$0xff]
        %v537 = vld [vmem:[#allocation11] sm:$0xff]
        %v538 = vld [vmem:[#allocation11 + $0x8] sm:$0xff]
        %v539 = vld [vmem:[#allocation11 + $0x10] sm:$0xff]
        %v540 = vld [vmem:[#allocation11 + $0x18] sm:$0xff]
        %v541 = vld [vmem:[#allocation11 + $0x20] sm:$0xff]
        %v542 = vld [vmem:[#allocation11 + $0x28] sm:$0xff]
        %v543 = vld [vmem:[#allocation11 + $0x30] sm:$0xff]
        %v544 = vld [vmem:[#allocation11 + $0x38] sm:$0xff]
        %v545 = vld [vmem:[#allocation11 + $0x40] sm:$0xff]
        %v546 = vld [vmem:[#allocation11 + $0x48] sm:$0xff]
        %v547 = vld [vmem:[#allocation11 + $0x50] sm:$0xff]
        %v548 = vld [vmem:[#allocation11 + $0x58] sm:$0xff]
        %v549 = vld [vmem:[#allocation11 + $0x60] sm:$0xff]
        %v550 = vld [vmem:[#allocation11 + $0x68] sm:$0xff]
        %v551 = vld [vmem:[#allocation11 + $0x70] sm:$0xff]
        %v552 = vld [vmem:[#allocation11 + $0x78] sm:$0xff]
        %v553 = vld [vmem:[#allocation11 + $0x80] sm:$0xff]
        %v554 = vld [vmem:[#allocation11 + $0x88] sm:$0xff]
        %v555 = vld [vmem:[#allocation11 + $0x90] sm:$0xff]
        %v556 = vld [vmem:[#allocation11 + $0x98] sm:$0xff]
        %v557 = vld [vmem:[#allocation11 + $0xa0] sm:$0xff]
        %v558 = vld [vmem:[#allocation11 + $0xa8] sm:$0xff]
        %v559 = vld [vmem:[#allocation11 + $0xb0] sm:$0xff]
        %v560 = vld [vmem:[#allocation11 + $0xb8] sm:$0xff]
        %v561 = vld [vmem:[#allocation11 + $0xc0] sm:$0xff]
        %v562 = vld [vmem:[#allocation11 + $0xc8] sm:$0xff]
        %v563 = vld [vmem:[#allocation11 + $0xd0] sm:$0xff]
        %v564 = vld [vmem:[#allocation11 + $0xd8] sm:$0xff]
        %v565 = vld [vmem:[#allocation11 + $0xe0] sm:$0xff]
        %v566 = vld [vmem:[#allocation11 + $0xe8] sm:$0xff]
        %v567 = vld [vmem:[#allocation11 + $0xf0] sm:$0xff]
        %v568 = vld [vmem:[#allocation11 + $0xf8] sm:$0xff]
        %v569 = vld [vmem:[#allocation13] sm:$0xff]
        %v570 = vld [vmem:[#allocation13 + $0x8] sm:$0xff]
        %v571 = vld [vmem:[#allocation13 + $0x10] sm:$0xff]
        %v572 = vld [vmem:[#allocation13 + $0x18] sm:$0xff]
        %v573 = vld [vmem:[#allocation13 + $0x20] sm:$0xff]
        %v574 = vld [vmem:[#allocation13 + $0x28] sm:$0xff]
        %v575 = vld [vmem:[#allocation13 + $0x30] sm:$0xff]
        %v576 = vld [vmem:[#allocation13 + $0x38] sm:$0xff]
        %v577 = vld [vmem:[#allocation13 + $0x40] sm:$0xff]
        %v578 = vld [vmem:[#allocation13 + $0x48] sm:$0xff]
        %v579 = vld [vmem:[#allocation13 + $0x50] sm:$0xff]
        %v580 = vld [vmem:[#allocation13 + $0x58] sm:$0xff]
        %v581 = vld [vmem:[#allocation13 + $0x60] sm:$0xff]
        %v582 = vld [vmem:[#allocation13 + $0x68] sm:$0xff]
        %v583 = vld [vmem:[#allocation13 + $0x70] sm:$0xff]
        %v584 = vld [vmem:[#allocation13 + $0x78] sm:$0xff]
        %v585 = vld [vmem:[%s7] sm:$0xf]
        %v586 = vld [vmem:[%s404] sm:$0xff]
        %v587 = vpack.c.bf16 %v586, %v586
        %v588 = vld [vmem:[%s413] sm:$0xff]
        %v589 = vpack.c.bf16 %v588, %v588
        %v590 = vld [vmem:[%s422] sm:$0xff]
        %v623 = vunpack.c.l.b16 %v505
        %v624 = vunpack.c.h.b16 %v505
        %v625 = vunpack.c.l.b16 %v506
        %v626 = vunpack.c.h.b16 %v506
        %v627 = vunpack.c.l.b16 %v507
        %v628 = vunpack.c.h.b16 %v507
        %v629 = vunpack.c.l.b16 %v508
        %v630 = vunpack.c.h.b16 %v508
        %v631 = vunpack.c.l.b16 %v509
        %v632 = vunpack.c.h.b16 %v509
        %v633 = vunpack.c.l.b16 %v510
        %v634 = vunpack.c.h.b16 %v510
        %v635 = vunpack.c.l.b16 %v511
        %v636 = vunpack.c.h.b16 %v511
        %v637 = vunpack.c.l.b16 %v512
        %v638 = vunpack.c.h.b16 %v512
        %v639 = vunpack.c.l.b16 %v513
        %v640 = vunpack.c.h.b16 %v513
        %v641 = vunpack.c.l.b16 %v514
        %v642 = vunpack.c.h.b16 %v514
        %v643 = vunpack.c.l.b16 %v515
        %v644 = vunpack.c.h.b16 %v515
        %v645 = vunpack.c.l.b16 %v516
        %v646 = vunpack.c.h.b16 %v516
        %v647 = vunpack.c.l.b16 %v517
        %v648 = vunpack.c.h.b16 %v517
        %v649 = vunpack.c.l.b16 %v518
        %v650 = vunpack.c.h.b16 %v518
        %v651 = vunpack.c.l.b16 %v519
        %v652 = vunpack.c.h.b16 %v519
        %v653 = vunpack.c.l.b16 %v520
        %v654 = vunpack.c.h.b16 %v520
        %v655 = vunpack.c.l.b16 %v521
        %v656 = vunpack.c.h.b16 %v521
        %v657 = vunpack.c.l.b16 %v522
        %v658 = vunpack.c.h.b16 %v522
        %v659 = vunpack.c.l.b16 %v523
        %v660 = vunpack.c.h.b16 %v523
        %v661 = vunpack.c.l.b16 %v524
        %v662 = vunpack.c.h.b16 %v524
        %v663 = vunpack.c.l.b16 %v525
        %v664 = vunpack.c.h.b16 %v525
        %v665 = vunpack.c.l.b16 %v526
        %v666 = vunpack.c.h.b16 %v526
        %v667 = vunpack.c.l.b16 %v527
        %v668 = vunpack.c.h.b16 %v527
        %v669 = vunpack.c.l.b16 %v528
        %v670 = vunpack.c.h.b16 %v528
        %v671 = vunpack.c.l.b16 %v529
        %v672 = vunpack.c.h.b16 %v529
        %v673 = vunpack.c.l.b16 %v530
        %v674 = vunpack.c.h.b16 %v530
        %v675 = vunpack.c.l.b16 %v531
        %v676 = vunpack.c.h.b16 %v531
        %v677 = vunpack.c.l.b16 %v532
        %v678 = vunpack.c.h.b16 %v532
        %v679 = vunpack.c.l.b16 %v533
        %v680 = vunpack.c.h.b16 %v533
        %v681 = vunpack.c.l.b16 %v534
        %v682 = vunpack.c.h.b16 %v534
        %v683 = vunpack.c.l.b16 %v535
        %v684 = vunpack.c.h.b16 %v535
        %v685 = vunpack.c.l.b16 %v536
        %v686 = vunpack.c.h.b16 %v536
        %v687 = vpack.c.b16 %v627, %v623
        %v688 = vpack.c.b16 %v628, %v624
        %v689 = vpack.c.b16 %v629, %v625
        %v690 = vpack.c.b16 %v630, %v626
        %v691 = vpack.c.b16 %v635, %v631
        %v692 = vpack.c.b16 %v636, %v632
        %v693 = vpack.c.b16 %v637, %v633
        %v694 = vpack.c.b16 %v638, %v634
        %v695 = vpack.c.b16 %v643, %v639
        %v696 = vpack.c.b16 %v644, %v640
        %v697 = vpack.c.b16 %v645, %v641
        %v698 = vpack.c.b16 %v646, %v642
        %v699 = vpack.c.b16 %v651, %v647
        %v700 = vpack.c.b16 %v652, %v648
        %v701 = vpack.c.b16 %v653, %v649
        %v702 = vpack.c.b16 %v654, %v650
        %v703 = vpack.c.b16 %v659, %v655
        %v704 = vpack.c.b16 %v660, %v656
        %v705 = vpack.c.b16 %v661, %v657
        %v706 = vpack.c.b16 %v662, %v658
        %v707 = vpack.c.b16 %v667, %v663
        %v708 = vpack.c.b16 %v668, %v664
        %v709 = vpack.c.b16 %v669, %v665
        %v710 = vpack.c.b16 %v670, %v666
        %v711 = vpack.c.b16 %v675, %v671
        %v712 = vpack.c.b16 %v676, %v672
        %v713 = vpack.c.b16 %v677, %v673
        %v714 = vpack.c.b16 %v678, %v674
        %v715 = vpack.c.b16 %v683, %v679
        %v716 = vpack.c.b16 %v684, %v680
        %v717 = vpack.c.b16 %v685, %v681
        %v718 = vpack.c.b16 %v686, %v682
        %751 = vmatprep.subr.bf16.mxu0 %v716
        %752 = vmatpush1.bf16.msra.mxu0 %v715
        %753 = vmatprep.subr.bf16.mxu0 %v712
        %754 = vmatpush1.bf16.msra.mxu0 %v711
        %755 = vmatprep.subr.bf16.mxu0 %v708
        %756 = vmatpush1.bf16.msra.mxu0 %v707
        %757 = vmatprep.subr.bf16.mxu0 %v704
        %758 = vmatpush1.bf16.msra.mxu0 %v703
        %759 = vmatprep.subr.bf16.mxu0 %v700
        %760 = vmatpush1.bf16.msra.mxu0 %v699
        %761 = vmatprep.subr.bf16.mxu0 %v696
        %762 = vmatpush1.bf16.msra.mxu0 %v695
        %763 = vmatprep.subr.bf16.mxu0 %v692
        %764 = vmatpush1.bf16.msra.mxu0 %v691
        %765 = vmatprep.subr.bf16.mxu0 %v688
        %766 = vmatpush1.bf16.msra.mxu0 %v687
        %767 = vmatprep.subr.bf16.mxu0 0
        %768 = vmatpush2.bf16.msra.mxu0 0
        %769 = vmatprep.subr.bf16.mxu0 0
        %770 = vmatpush2.bf16.msra.mxu0 0
        %771 = vmatprep.subr.bf16.mxu0 0
        %772 = vmatpush2.bf16.msra.mxu0 0
        %773 = vmatprep.subr.bf16.mxu0 0
        %774 = vmatpush2.bf16.msra.mxu0 0
        %775 = vmatprep.subr.bf16.mxu0 0
        %776 = vmatpush2.bf16.msra.mxu0 0
        %777 = vmatprep.subr.bf16.mxu0 0
        %778 = vmatpush2.bf16.msra.mxu0 0
        %779 = vmatprep.subr.bf16.mxu0 0
        %780 = vmatpush2.bf16.msra.mxu0 0
        %781 = vmatprep.subr.bf16.mxu0 0
        %782 = vmatpush2.bf16.msra.mxu0 0
        %783 = vmatprep.mubr.bf16.mxu0 0
        %784 = vmatmul.mubr.bf16.gmra.mxu0 %v589
        %v785 = vpop.f32.mrf.mxu0
        %v786 = vadd.f32 0.0, %v785
        %v787 = vpop.f32.mrf.mxu0
        %v788 = vadd.f32 0.0, %v787
        %v789 = vpop.f32.mrf.mxu0
        %v790 = vpop.f32.mrf.mxu0
        %791 = vdwg.mxu0
        %792 = vmatprep.subr.bf16.mxu0 %v718
        %793 = vmatpush1.bf16.msra.mxu0 %v717
        %794 = vmatprep.subr.bf16.mxu0 %v714
        %795 = vmatpush1.bf16.msra.mxu0 %v713
        %796 = vmatprep.subr.bf16.mxu0 %v710
        %797 = vmatpush1.bf16.msra.mxu0 %v709
        %798 = vmatprep.subr.bf16.mxu0 %v706
        %799 = vmatpush1.bf16.msra.mxu0 %v705
        %800 = vmatprep.subr.bf16.mxu0 %v702
        %801 = vmatpush1.bf16.msra.mxu0 %v701
        %802 = vmatprep.subr.bf16.mxu0 %v698
        %803 = vmatpush1.bf16.msra.mxu0 %v697
        %804 = vmatprep.subr.bf16.mxu0 %v694
        %805 = vmatpush1.bf16.msra.mxu0 %v693
        %806 = vmatprep.subr.bf16.mxu0 %v690
        %807 = vmatpush1.bf16.msra.mxu0 %v689
        %808 = vmatprep.subr.bf16.mxu0 0
        %809 = vmatpush2.bf16.msra.mxu0 0
        %810 = vmatprep.subr.bf16.mxu0 0
        %811 = vmatpush2.bf16.msra.mxu0 0
        %812 = vmatprep.subr.bf16.mxu0 0
        %813 = vmatpush2.bf16.msra.mxu0 0
        %814 = vmatprep.subr.bf16.mxu0 0
        %815 = vmatpush2.bf16.msra.mxu0 0
        %816 = vmatprep.subr.bf16.mxu0 0
        %817 = vmatpush2.bf16.msra.mxu0 0
        %818 = vmatprep.subr.bf16.mxu0 0
        %819 = vmatpush2.bf16.msra.mxu0 0
        %820 = vmatprep.subr.bf16.mxu0 0
        %821 = vmatpush2.bf16.msra.mxu0 0
        %822 = vmatprep.subr.bf16.mxu0 0
        %823 = vmatpush2.bf16.msra.mxu0 0
        %824 = vmatprep.mubr.bf16.mxu0 0
        %825 = vmatmul.mubr.bf16.gmra.mxu0 %v589
        %v826 = vpop.f32.mrf.mxu0
        %v827 = vadd.f32 0.0, %v826
        %v828 = vpop.f32.mrf.mxu0
        %v829 = vadd.f32 0.0, %v828
        %v830 = vpop.f32.mrf.mxu0
        %v831 = vpop.f32.mrf.mxu0
        %832 = vdwg.mxu0
        %v849 = vunpack.c.l.b16 %v489
        %v850 = vunpack.c.h.b16 %v489
        %v851 = vunpack.c.l.b16 %v490
        %v852 = vunpack.c.h.b16 %v490
        %v853 = vunpack.c.l.b16 %v491
        %v854 = vunpack.c.h.b16 %v491
        %v855 = vunpack.c.l.b16 %v492
        %v856 = vunpack.c.h.b16 %v492
        %v857 = vunpack.c.l.b16 %v493
        %v858 = vunpack.c.h.b16 %v493
        %v859 = vunpack.c.l.b16 %v494
        %v860 = vunpack.c.h.b16 %v494
        %v861 = vunpack.c.l.b16 %v495
        %v862 = vunpack.c.h.b16 %v495
        %v863 = vunpack.c.l.b16 %v496
        %v864 = vunpack.c.h.b16 %v496
        %v865 = vunpack.c.l.b16 %v497
        %v866 = vunpack.c.h.b16 %v497
        %v867 = vunpack.c.l.b16 %v498
        %v868 = vunpack.c.h.b16 %v498
        %v869 = vunpack.c.l.b16 %v499
        %v870 = vunpack.c.h.b16 %v499
        %v871 = vunpack.c.l.b16 %v500
        %v872 = vunpack.c.h.b16 %v500
        %v873 = vunpack.c.l.b16 %v501
        %v874 = vunpack.c.h.b16 %v501
        %v875 = vunpack.c.l.b16 %v502
        %v876 = vunpack.c.h.b16 %v502
        %v877 = vunpack.c.l.b16 %v503
        %v878 = vunpack.c.h.b16 %v503
        %v879 = vunpack.c.l.b16 %v504
        %v880 = vunpack.c.h.b16 %v504
        %v881 = vpack.c.b16 %v853, %v849
        %v882 = vpack.c.b16 %v854, %v850
        %v883 = vpack.c.b16 %v855, %v851
        %v884 = vpack.c.b16 %v856, %v852
        %v885 = vpack.c.b16 %v861, %v857
        %v886 = vpack.c.b16 %v862, %v858
        %v887 = vpack.c.b16 %v863, %v859
        %v888 = vpack.c.b16 %v864, %v860
        %v889 = vpack.c.b16 %v869, %v865
        %v890 = vpack.c.b16 %v870, %v866
        %v891 = vpack.c.b16 %v871, %v867
        %v892 = vpack.c.b16 %v872, %v868
        %v893 = vpack.c.b16 %v877, %v873
        %v894 = vpack.c.b16 %v878, %v874
        %v895 = vpack.c.b16 %v879, %v875
        %v896 = vpack.c.b16 %v880, %v876
        %vm913 = vcmask 523264
        %v915 = vsel %vm913, %v587, 0
        %917 = vmatprep.subr.bf16.mxu0 0
        %918 = vmatpush1.bf16.msra.mxu0 0
        %919 = vmatprep.subr.bf16.mxu0 0
        %920 = vmatpush1.bf16.msra.mxu0 0
        %921 = vmatprep.subr.bf16.mxu0 0
        %922 = vmatpush1.bf16.msra.mxu0 0
        %923 = vmatprep.subr.bf16.mxu0 0
        %924 = vmatpush1.bf16.msra.mxu0 0
        %925 = vmatprep.subr.bf16.mxu0 %v894
        %926 = vmatpush1.bf16.msra.mxu0 %v893
        %927 = vmatprep.subr.bf16.mxu0 %v890
        %928 = vmatpush1.bf16.msra.mxu0 %v889
        %929 = vmatprep.subr.bf16.mxu0 %v886
        %930 = vmatpush1.bf16.msra.mxu0 %v885
        %931 = vmatprep.subr.bf16.mxu0 %v882
        %932 = vmatpush1.bf16.msra.mxu0 %v881
        %933 = vmatprep.subr.bf16.mxu0 0
        %934 = vmatpush2.bf16.msra.mxu0 0
        %935 = vmatprep.subr.bf16.mxu0 0
        %936 = vmatpush2.bf16.msra.mxu0 0
        %937 = vmatprep.subr.bf16.mxu0 0
        %938 = vmatpush2.bf16.msra.mxu0 0
        %939 = vmatprep.subr.bf16.mxu0 0
        %940 = vmatpush2.bf16.msra.mxu0 0
        %941 = vmatprep.subr.bf16.mxu0 0
        %942 = vmatpush2.bf16.msra.mxu0 0
        %943 = vmatprep.subr.bf16.mxu0 0
        %944 = vmatpush2.bf16.msra.mxu0 0
        %945 = vmatprep.subr.bf16.mxu0 0
        %946 = vmatpush2.bf16.msra.mxu0 0
        %947 = vmatprep.subr.bf16.mxu0 0
        %948 = vmatpush2.bf16.msra.mxu0 0
        %949 = vmatprep.mubr.bf16.mxu0 0
        %950 = vmatmul.mubr.bf16.gmra.mxu0 %v915
        %v951 = vpop.f32.mrf.mxu0
        %v952 = vadd.f32 %v786, %v951
        %v953 = vpop.f32.mrf.mxu0
        %v954 = vadd.f32 %v788, %v953
        %v955 = vpop.f32.mrf.mxu0
        %v956 = vpop.f32.mrf.mxu0
        %957 = vdwg.mxu0
        %958 = vmatprep.subr.bf16.mxu0 0
        %959 = vmatpush1.bf16.msra.mxu0 0
        %960 = vmatprep.subr.bf16.mxu0 0
        %961 = vmatpush1.bf16.msra.mxu0 0
        %962 = vmatprep.subr.bf16.mxu0 0
        %963 = vmatpush1.bf16.msra.mxu0 0
        %964 = vmatprep.subr.bf16.mxu0 0
        %965 = vmatpush1.bf16.msra.mxu0 0
        %966 = vmatprep.subr.bf16.mxu0 %v896
        %967 = vmatpush1.bf16.msra.mxu0 %v895
        %968 = vmatprep.subr.bf16.mxu0 %v892
        %969 = vmatpush1.bf16.msra.mxu0 %v891
        %970 = vmatprep.subr.bf16.mxu0 %v888
        %971 = vmatpush1.bf16.msra.mxu0 %v887
        %972 = vmatprep.subr.bf16.mxu0 %v884
        %973 = vmatpush1.bf16.msra.mxu0 %v883
        %974 = vmatprep.subr.bf16.mxu0 0
        %975 = vmatpush2.bf16.msra.mxu0 0
        %976 = vmatprep.subr.bf16.mxu0 0
        %977 = vmatpush2.bf16.msra.mxu0 0
        %978 = vmatprep.subr.bf16.mxu0 0
        %979 = vmatpush2.bf16.msra.mxu0 0
        %980 = vmatprep.subr.bf16.mxu0 0
        %981 = vmatpush2.bf16.msra.mxu0 0
        %982 = vmatprep.subr.bf16.mxu0 0
        %983 = vmatpush2.bf16.msra.mxu0 0
        %984 = vmatprep.subr.bf16.mxu0 0
        %985 = vmatpush2.bf16.msra.mxu0 0
        %986 = vmatprep.subr.bf16.mxu0 0
        %987 = vmatpush2.bf16.msra.mxu0 0
        %988 = vmatprep.subr.bf16.mxu0 0
        %989 = vmatpush2.bf16.msra.mxu0 0
        %990 = vmatprep.mubr.bf16.mxu0 0
        %991 = vmatmul.mubr.bf16.gmra.mxu0 %v915
        %v992 = vpop.f32.mrf.mxu0
        %v993 = vadd.f32 %v827, %v992
        %v994 = vpop.f32.mrf.mxu0
        %v995 = vadd.f32 %v829, %v994
        %v996 = vpop.f32.mrf.mxu0
        %v997 = vpop.f32.mrf.mxu0
        %998 = vdwg.mxu0
        %v1000 = vlaneseq
        %v1001 = vshrl.u32 %v1000, 7
        %v1002 = vsub.s32 0, %v1001
        %v1003 = vrot.slane %v585, %v1002
        %v1004 = vlaneseq
        %v1005 = vshrl.u32 %v1004, 7
        %v1006 = vsub.s32 1, %v1005
        %v1007 = vrot.slane %v585, %v1006
        %v1008 = vlaneseq
        %v1009 = vshrl.u32 %v1008, 7
        %v1010 = vsub.s32 2, %v1009
        %v1011 = vrot.slane %v585, %v1010
        %v1012 = vlaneseq
        %v1013 = vshrl.u32 %v1012, 7
        %v1014 = vsub.s32 3, %v1013
        %v1015 = vrot.slane %v585, %v1014
        %v1020 = vadd.f32 %v952, %v1003
        %v1021 = vadd.f32 %v954, %v1007
        %v1022 = vadd.f32 %v993, %v1011
        %v1023 = vadd.f32 %v995, %v1015
        %1024 = vmatprep.subr.mxu0 %v568
        %1025 = vmatpush1.msra.mxu0 %v567
        %1026 = vmatprep.subr.mxu0 %v566
        %1027 = vmatpush1.msra.mxu0 %v565
        %1028 = vmatprep.subr.mxu0 %v564
        %1029 = vmatpush1.msra.mxu0 %v563
        %1030 = vmatprep.subr.mxu0 %v562
        %1031 = vmatpush1.msra.mxu0 %v561
        %1032 = vmatprep.subr.mxu0 %v560
        %1033 = vmatpush1.msra.mxu0 %v559
        %1034 = vmatprep.subr.mxu0 %v558
        %1035 = vmatpush1.msra.mxu0 %v557
        %1036 = vmatprep.subr.mxu0 %v556
        %1037 = vmatpush1.msra.mxu0 %v555
        %1038 = vmatprep.subr.mxu0 %v554
        %1039 = vmatpush1.msra.mxu0 %v553
        %1040 = vmatprep.subr.mxu0 %v552
        %1041 = vmatpush1.msra.mxu0 %v551
        %1042 = vmatprep.subr.mxu0 %v550
        %1043 = vmatpush1.msra.mxu0 %v549
        %1044 = vmatprep.subr.mxu0 %v548
        %1045 = vmatpush1.msra.mxu0 %v547
        %1046 = vmatprep.subr.mxu0 %v546
        %1047 = vmatpush1.msra.mxu0 %v545
        %1048 = vmatprep.subr.mxu0 %v544
        %1049 = vmatpush1.msra.mxu0 %v543
        %1050 = vmatprep.subr.mxu0 %v542
        %1051 = vmatpush1.msra.mxu0 %v541
        %1052 = vmatprep.subr.mxu0 %v540
        %1053 = vmatpush1.msra.mxu0 %v539
        %1054 = vmatprep.subr.mxu0 %v538
        %1055 = vmatpush1.msra.mxu0 %v537
        %1056 = vmatprep.subr.mxu0 0.0
        %1057 = vmatpush2.msra.mxu0 0.0
        %1058 = vmatprep.subr.mxu0 0.0
        %1059 = vmatpush2.msra.mxu0 0.0
        %1060 = vmatprep.subr.mxu0 0.0
        %1061 = vmatpush2.msra.mxu0 0.0
        %1062 = vmatprep.subr.mxu0 0.0
        %1063 = vmatpush2.msra.mxu0 0.0
        %1064 = vmatprep.subr.mxu0 0.0
        %1065 = vmatpush2.msra.mxu0 0.0
        %1066 = vmatprep.subr.mxu0 0.0
        %1067 = vmatpush2.msra.mxu0 0.0
        %1068 = vmatprep.subr.mxu0 0.0
        %1069 = vmatpush2.msra.mxu0 0.0
        %1070 = vmatprep.subr.mxu0 0.0
        %1071 = vmatpush2.msra.mxu0 0.0
        %1072 = vmatprep.subr.mxu0 0.0
        %1073 = vmatpush2.msra.mxu0 0.0
        %1074 = vmatprep.subr.mxu0 0.0
        %1075 = vmatpush2.msra.mxu0 0.0
        %1076 = vmatprep.subr.mxu0 0.0
        %1077 = vmatpush2.msra.mxu0 0.0
        %1078 = vmatprep.subr.mxu0 0.0
        %1079 = vmatpush2.msra.mxu0 0.0
        %1080 = vmatprep.subr.mxu0 0.0
        %1081 = vmatpush2.msra.mxu0 0.0
        %1082 = vmatprep.subr.mxu0 0.0
        %1083 = vmatpush2.msra.mxu0 0.0
        %1084 = vmatprep.subr.mxu0 0.0
        %1085 = vmatpush2.msra.mxu0 0.0
        %1086 = vmatprep.subr.mxu0 0.0
        %1087 = vmatpush2.msra.mxu0 0.0
        %1088 = vmatprep.mubr.f32.mxu0 0.0
        %1089 = vmatmul.mubr.f32.gmra.mxu0 %v590
        %v1090 = vpop.f32.mrf.mxu0
        %v1091 = vadd.f32 0.0, %v1090
        %v1092 = vpop.f32.mrf.mxu0
        %v1093 = vadd.f32 0.0, %v1092
        %1094 = vdwg.mxu0
        %v1095 = vadd.f32 %v1020, %v1091
        %v1096 = vmul.f32 %v1095, 0.5
        %v1097 = vtanh.pop %v1096
        %v1098 = vadd.f32 %v1097, 1.0
        %v1099 = vmul.f32 %v1098, 0.5
        %v1100 = vadd.f32 %v1021, %v1093
        %v1101 = vmul.f32 %v1100, 0.5
        %v1102 = vtanh.pop %v1101
        %v1103 = vadd.f32 %v1102, 1.0
        %v1104 = vmul.f32 %v1103, 0.5
        %v1105 = vmul.f32 %v1099, %v590
        %v1106 = vand.u32 2147483647, %v1022
        %v1107 = vadd.f32 %v1106, 1.0
        %v1108 = vrcp.pop %v1107
        %v1109 = vmul.f32 %v1022, %v1108
        %v1110 = vmul.f32 %v1104, %v1109
        %v1111 = vadd.f32 %v1105, %v1110
        %1112 = vmatprep.subr.mxu0 0.0
        %1113 = vmatpush1.msra.mxu0 %v584
        %1114 = vmatprep.subr.mxu0 0.0
        %1115 = vmatpush1.msra.mxu0 %v583
        %1116 = vmatprep.subr.mxu0 0.0
        %1117 = vmatpush1.msra.mxu0 %v582
        %1118 = vmatprep.subr.mxu0 0.0
        %1119 = vmatpush1.msra.mxu0 %v581
        %1120 = vmatprep.subr.mxu0 0.0
        %1121 = vmatpush1.msra.mxu0 %v580
        %1122 = vmatprep.subr.mxu0 0.0
        %1123 = vmatpush1.msra.mxu0 %v579
        %1124 = vmatprep.subr.mxu0 0.0
        %1125 = vmatpush1.msra.mxu0 %v578
        %1126 = vmatprep.subr.mxu0 0.0
        %1127 = vmatpush1.msra.mxu0 %v577
        %1128 = vmatprep.subr.mxu0 0.0
        %1129 = vmatpush1.msra.mxu0 %v576
        %1130 = vmatprep.subr.mxu0 0.0
        %1131 = vmatpush1.msra.mxu0 %v575
        %1132 = vmatprep.subr.mxu0 0.0
        %1133 = vmatpush1.msra.mxu0 %v574
        %1134 = vmatprep.subr.mxu0 0.0
        %1135 = vmatpush1.msra.mxu0 %v573
        %1136 = vmatprep.subr.mxu0 0.0
        %1137 = vmatpush1.msra.mxu0 %v572
        %1138 = vmatprep.subr.mxu0 0.0
        %1139 = vmatpush1.msra.mxu0 %v571
        %1140 = vmatprep.subr.mxu0 0.0
        %1141 = vmatpush1.msra.mxu0 %v570
        %1142 = vmatprep.subr.mxu0 0.0
        %1143 = vmatpush1.msra.mxu0 %v569
        %1144 = vmatprep.subr.mxu0 0.0
        %1145 = vmatpush2.msra.mxu0 0.0
        %1146 = vmatprep.subr.mxu0 0.0
        %1147 = vmatpush2.msra.mxu0 0.0
        %1148 = vmatprep.subr.mxu0 0.0
        %1149 = vmatpush2.msra.mxu0 0.0
        %1150 = vmatprep.subr.mxu0 0.0
        %1151 = vmatpush2.msra.mxu0 0.0
        %1152 = vmatprep.subr.mxu0 0.0
        %1153 = vmatpush2.msra.mxu0 0.0
        %1154 = vmatprep.subr.mxu0 0.0
        %1155 = vmatpush2.msra.mxu0 0.0
        %1156 = vmatprep.subr.mxu0 0.0
        %1157 = vmatpush2.msra.mxu0 0.0
        %1158 = vmatprep.subr.mxu0 0.0
        %1159 = vmatpush2.msra.mxu0 0.0
        %1160 = vmatprep.subr.mxu0 0.0
        %1161 = vmatpush2.msra.mxu0 0.0
        %1162 = vmatprep.subr.mxu0 0.0
        %1163 = vmatpush2.msra.mxu0 0.0
        %1164 = vmatprep.subr.mxu0 0.0
        %1165 = vmatpush2.msra.mxu0 0.0
        %1166 = vmatprep.subr.mxu0 0.0
        %1167 = vmatpush2.msra.mxu0 0.0
        %1168 = vmatprep.subr.mxu0 0.0
        %1169 = vmatpush2.msra.mxu0 0.0
        %1170 = vmatprep.subr.mxu0 0.0
        %1171 = vmatpush2.msra.mxu0 0.0
        %1172 = vmatprep.subr.mxu0 0.0
        %1173 = vmatpush2.msra.mxu0 0.0
        %1174 = vmatprep.subr.mxu0 0.0
        %1175 = vmatpush2.msra.mxu0 0.0
        %1176 = vmatprep.mubr.f32.mxu0 0.0
        %1177 = vmatmul.mubr.f32.gmra.mxu0 %v1111
        %v1178 = vpop.f32.mrf.mxu0
        %v1179 = vadd.f32 0.0, %v1178
        %v1180 = vpop.f32.mrf.mxu0
        %1181 = vdwg.mxu0
        %v1182 = vadd.f32 %v1023, %v1179
        %v1183 = vmul.f32 %v1182, 0.5
        %v1184 = vtanh.pop %v1183
        %v1185 = vadd.f32 %v1184, 1.0
        %v1186 = vmul.f32 %v1185, 0.5
        %v1187 = vand.u32 2147483647, %v1111
        %v1188 = vadd.f32 %v1187, 1.0
        %v1189 = vrcp.pop %v1188
        %v1190 = vmul.f32 %v1111, %v1189
        %v1191 = vmul.f32 %v1186, %v1190
        %1192 = vst [vmem:[%s480] sm:$0xff] %v1191
        %1193 = vst [vmem:[%s487] sm:$0xff] %v1111
        %s1194 = sand.u32 %s226, 1
        %s1195 = scalar_lea.sflag [#allocation4], %s1194
        %s1196 = sand.u32 %s226, 1
        %s1197 = smul.addr %s1196, 8
        %s1198 = scalar_lea.vmem [#allocation14], %s1197
        %s1199 = sand.u32 %s252, 1
        %s1200 = scalar_lea.sflag [#allocation16], %s1199
        %s1201 = sand.u32 %s252, 1
        %s1202 = smul.addr %s1201, 8
        %s1203 = scalar_lea.vmem [#allocation15], %s1202
        // Predicated region
        $region81: #{tpu_custom_call.1} parent=51 // pred_check
          %p1204 = pneg %p236
        $region82: #{tpu_custom_call.1} parent=51 // pred_check_branch
          %1206 = sbr.rel (%p1204) target = $region84
        $region83: #{tpu_custom_call.1} parent=51 // pred_region
          %s1208 = ssub.s32 128, 128
          %1209 = vsyncadd %s1195, %s1208
          %s1210 = smul.addr %s35, 128
          %s1211 = scalar_lea.hbm %s8, %s1210
          %s1213 = sshll.u32 %s1198, 4
          %s1214 = int_to_ptr.vmem [resolvable:$true] %s1213
          %1216 = dma.vmem_to_hbm [thread:$0]  %s1214, 128, %s1211, %s1195
        $region84: #{tpu_custom_call.1} parent=51 // pred_fallthru
          _
        // Predicated region
        $region85: #{tpu_custom_call.1} parent=51 // pred_check
          %p1217 = pneg %p262
        $region86: #{tpu_custom_call.1} parent=51 // pred_check_branch
          %1219 = sbr.rel (%p1217) target = $region88
        $region87: #{tpu_custom_call.1} parent=51 // pred_region
          %s1221 = ssub.s32 128, 128
          %1222 = vsyncadd %s1200, %s1221
          %s1223 = smul.addr %s35, 128
          %s1224 = scalar_lea.hbm %s9, %s1223
          %s1226 = sshll.u32 %s1203, 4
          %s1227 = int_to_ptr.vmem [resolvable:$true] %s1226
          %1229 = dma.vmem_to_hbm [thread:$0]  %s1227, 128, %s1224, %s1200
        $region88: #{tpu_custom_call.1} parent=51 // pred_fallthru
          _
      $region52: #{tpu_custom_call.1} parent=5 // pred_fallthru
        _
      %p1230 = scmp.le.s32.totalorder 2, %s30
      // Predicated region
      $region89: #{tpu_custom_call.1} parent=5 // pred_check
        %p1231 = pneg %p1230
      $region90: #{tpu_custom_call.1} parent=5 // pred_check_branch
        %1233 = sbr.rel (%p1231) target = $region92
      $region91: #{tpu_custom_call.1} parent=5 // pred_region
        %s1234 = ssub.s32 %s30, 2
        // Predicated region
        $region93: #{tpu_custom_call.1} parent=91 // pred_check
          %p1235 = pneg %p242
        $region94: #{tpu_custom_call.1} parent=91 // pred_check_branch
          %1237 = sbr.rel (%p1235) target = $region96
        $region95: #{tpu_custom_call.1} parent=91 // pred_region
          %s1238 = sand.u32 %s227, 1
          %s1239 = scalar_lea.sflag [#allocation4], %s1238
          %s1240 = sand.u32 %s227, 1
          %s1241 = smul.addr %s1240, 8
          %s1242 = scalar_lea.vmem [#allocation14], %s1241
          %1243 = dma.done %s1239, 128
        $region96: #{tpu_custom_call.1} parent=91 // pred_fallthru
          _
        // Predicated region
        $region97: #{tpu_custom_call.1} parent=91 // pred_check
          %p1244 = pneg %p268
        $region98: #{tpu_custom_call.1} parent=91 // pred_check_branch
          %1246 = sbr.rel (%p1244) target = $region100
        $region99: #{tpu_custom_call.1} parent=91 // pred_region
          %s1247 = sand.u32 %s253, 1
          %s1248 = scalar_lea.sflag [#allocation16], %s1247
          %s1249 = sand.u32 %s253, 1
          %s1250 = smul.addr %s1249, 8
          %s1251 = scalar_lea.vmem [#allocation15], %s1250
          %1252 = dma.done %s1248, 128
        $region100: #{tpu_custom_call.1} parent=91 // pred_fallthru
          _
      $region92: #{tpu_custom_call.1} parent=5 // pred_fallthru
        _
    $region6: #{tpu_custom_call.1} parent=1 // loop_footer
      %s34 = sadd.s32 1, %s30
    $region7: #{tpu_custom_call.1} parent=1 // loop_footer_branch
      %29 = sbr.rel target = $region3
    $region8: #{tpu_custom_call.1} parent=1 // loop_exit
      _
    %1253 = vsyncpa [#allocation3], 1
    %s1254 = scalar_lea.sflag [#allocation3], 1
    %1255 = vsyncpa %s1254, 1
    %1256 = vsyncpa [#allocation6], 1
    %s1257 = scalar_lea.sflag [#allocation6], 1
    %1258 = vsyncpa %s1257, 1
    %1259 = vsyncpa [#allocation9], 1
    %1260 = vsyncpa [#allocation12], 1
    %1261 = vsyncpa [#allocation4], 1
    %s1262 = scalar_lea.sflag [#allocation4], 1
    %1263 = vsyncpa %s1262, 1
    %1264 = vsyncpa [#allocation16], 1
    %s1265 = scalar_lea.sflag [#allocation16], 1
    %1266 = vsyncpa %s1265, 1

</llo_original>
